<compile_context>
chip_gen: v6e
topology: v6e:2x2x1
jax: 0.10.0
libtpu: 0.0.40
codegen_flags: <defaults>
</compile_context>

<pallas_src>
import jax
import jax.numpy as jnp
from jax.experimental import pallas as pl
from jax.experimental.pallas import tpu as pltpu


_LANE = 128          # TPU lane width
_MAX_TB = 4096       # batch-tile cap (VMEM is never the constraint here)

_COMPILER_PARAMS = pltpu.CompilerParams(dimension_semantics=("parallel",))


# ---------------------------------------------------------------------------
# Kernel (batch-on-lanes: x^T [F, TB], weights [out, in], biases [out, 1])
# ---------------------------------------------------------------------------
def _critic_kernel(xt_ref,
                   w1_ref, b1_ref,
                   w2_ref, b2_ref,
                   w3_ref, b3_ref,
                   w4_ref, b4_ref,
                   o_ref):
    # Widen the streamed (possibly bf16) activations once; everything below is
    # f32 (MXU accumulation, bias add, ReLU).
    x = xt_ref[...].astype(jnp.float32)                                # [F, TB]

    # FC1 + ReLU : [32, F] @ [F, TB] -> [32, TB]
    h = jnp.dot(w1_ref[...], x, preferred_element_type=jnp.float32)
    h = jnp.maximum(h + b1_ref[...], 0.0)
    # FC2 + ReLU : [64, 32] @ [32, TB] -> [64, TB]
    h = jnp.dot(w2_ref[...], h, preferred_element_type=jnp.float32)
    h = jnp.maximum(h + b2_ref[...], 0.0)
    # FC3 + ReLU : [32, 64] @ [64, TB] -> [32, TB]
    h = jnp.dot(w3_ref[...], h, preferred_element_type=jnp.float32)
    h = jnp.maximum(h + b3_ref[...], 0.0)
    # FC4 : [1, 32] @ [32, TB] -> [1, TB]  (lane-dense output row)
    out = jnp.dot(w4_ref[...], h, preferred_element_type=jnp.float32) + b4_ref[...]
    o_ref[...] = out.astype(o_ref.dtype)


# ---------------------------------------------------------------------------
# Wrappers
# ---------------------------------------------------------------------------
def _choose_block_b(B, block_b=None):
    """Batch (lane) tile: the whole batch, or a multiple of 128.

    Defaults: a single tile for modest B; otherwise a 128-multiple capped at
    _MAX_TB, chosen so there are >= 2 grid steps (lets ("parallel",) shard
    the batch across both v7x TensorCores; harmless on v5e/v6e).
    """
    if block_b is None:
        if B <= 2 * _LANE:
            return B
        block_b = min(_MAX_TB, pl.cdiv(B, 2))
    tb = max(_LANE, (block_b // _LANE) * _LANE)   # keep the lane dim 128-aligned
    return B if tb >= B else tb


def _resident_spec(shape):
    """Full-array BlockSpec pinned at block (0,...) for every grid step."""
    nd = len(shape)
    # ndim captured via default arg (avoids late-binding lambda bugs).
    return pl.BlockSpec(shape, lambda *_i, _nd=nd: (0,) * _nd)


def _cost_estimate(B, F, act_dtype):
    flops = 2 * B * (F * 32 + 32 * 64 + 64 * 32 + 32 * 1)
    act_bytes = B * F * jnp.dtype(act_dtype).itemsize
    weight_bytes = 4 * (F * 32 + 32 + 32 * 64 + 64 + 64 * 32 + 32 + 1 * 32 + 1)
    out_bytes = B * 4
    return pl.CostEstimate(flops=flops, transcendentals=0,
                           bytes_accessed=act_bytes + weight_bytes + out_bytes)


def critic_forward(obs_act, params, block_b=None,
                   activation_dtype=jnp.bfloat16):
    """Critic.forward: obs_act [B, obs_dim + 2*act_dim] -> [B, 1].

    Activations are streamed to the kernel as a transposed [F, B] slab in
    `activation_dtype` (default bf16, ~2x less HBM traffic); all in-kernel
    math accumulates in f32.  Use activation_dtype=jnp.float32 for exact f32.
    """
    B, F = obs_act.shape
    tb = _choose_block_b(B, block_b)
    grid = (pl.cdiv(B, tb),)

    # One fused XLA transpose+cast; no padding copy (ragged last tile is
    # handled by Pallas: masked output stores, per-column-independent math).
    x_t = obs_act.T.astype(activation_dtype)                       # [F, B]

    weights = (params["w1"], params["b1"],
               params["w2"], params["b2"],
               params["w3"], params["b3"],
               params["w4"], params["b4"])

    in_specs = ([pl.BlockSpec((F, tb), lambda i: (0, i))]
                + [_resident_spec(w.shape) for w in weights])
    out_spec = pl.BlockSpec((1, tb), lambda i: (0, i))

    out = pl.pallas_call(
        _critic_kernel,
        out_shape=jax.ShapeDtypeStruct((1, B), jnp.float32),
        grid=grid,
        in_specs=in_specs,
        out_specs=out_spec,
        compiler_params=_COMPILER_PARAMS,
        cost_estimate=_cost_estimate(B, F, activation_dtype),
    )(x_t, *weights)
    return out.reshape(B, 1)


def critic_cat_forward(obs, leader_act, follower_act, params, axis=-1,
                       block_b=None, activation_dtype=jnp.bfloat16):
    """Critic.cat_forward: concat along the feature axis, then forward().

    The concat is done once upstream (a single fused XLA op feeding one
    [B, F] stream) rather than three separate input pipelines in the kernel.
    """
    if axis not in (-1, 1):
        raise ValueError("cat_forward only supports the feature axis (dim=-1/1)")
    obs_act = jnp.concatenate((obs, leader_act, follower_act), axis=-1)
    return critic_forward(obs_act, params, block_b=block_b,
                          activation_dtype=activation_dtype)


# ---------------------------------------------------------------------------
# Parameter init (PyTorch nn.Linear layout: W [out, in], b [out, 1])
# ---------------------------------------------------------------------------
def init_critic_params(key, dim_observation, dim_action):
    in_dim = dim_observation + 2 * dim_action
    sizes = [(in_dim, 32), (32, 64), (64, 32), (32, 1)]
    params = {}
    for idx, (fan_in, fan_out) in enumerate(sizes, start=1):
        key, kw, kb = jax.random.split(key, 3)
        bound = 1.0 / jnp.sqrt(fan_in)
        params[f"w{idx}"] = jax.random.uniform(
            kw, (fan_out, fan_in), jnp.float32, -bound, bound)
        params[f"b{idx}"] = jax.random.uniform(
            kb, (fan_out, 1), jnp.float32, -bound, bound)
    return params


def _reference_forward(obs_act, params):
    h = jax.nn.relu(obs_act @ params["w1"].T + params["b1"].T)
    h = jax.nn.relu(h @ params["w2"].T + params["b2"].T)
    h = jax.nn.relu(h @ params["w3"].T + params["b3"].T)
    return h @ params["w4"].T + params["b4"].T


# ---------------------------------------------------------------------------
# Demo / self-test
# ---------------------------------------------------------------------------
if __name__ == "__main__":
    key = jax.random.PRNGKey(0)
    dim_observation = 12
    dim_action = 4
    batch = 8

    kparams, kobs, klead, kfol = jax.random.split(key, 4)
    params = init_critic_params(kparams, dim_observation, dim_action)

    obs = jax.random.normal(kobs, (batch, dim_observation), jnp.float32)
    leader_act = jax.random.normal(klead, (batch, dim_action), jnp.float32)
    follower_act = jax.random.normal(kfol, (batch, dim_action), jnp.float32)
    obs_act = jnp.concatenate((obs, leader_act, follower_act), axis=-1)

    ref = _reference_forward(obs_act, params)

    # 1) f32 activation path: bit-level check of the kernel math.
    out_f32 = critic_forward(obs_act, params, activation_dtype=jnp.float32)
    jax.block_until_ready(out_f32)
    assert out_f32.shape == (batch, 1)
    assert jnp.allclose(out_f32, ref, atol=1e-4, rtol=1e-4)

    # 2) Default bf16-streamed path (forward and fused cat_forward).
    out = critic_forward(obs_act, params)
    out_cat = critic_cat_forward(obs, leader_act, follower_act, params, axis=-1)
    jax.block_until_ready(out)
    jax.block_until_ready(out_cat)
    assert out.shape == (batch, 1) and out_cat.shape == (batch, 1)
    assert jnp.allclose(out, ref, atol=5e-2, rtol=5e-2)
    assert jnp.allclose(out_cat, ref, atol=5e-2, rtol=5e-2)

    # 3) Multi-step, ragged grid (B=300 -> 3 lane-tiles of 128, last partial);
    #    exercises the parallel batch axis and masked last-tile stores.
    batch2 = 300
    obs_act2 = jax.random.normal(
        jax.random.PRNGKey(1), (batch2, dim_observation + 2 * dim_action),
        jnp.float32)
    out2 = critic_forward(obs_act2, params)
    jax.block_until_ready(out2)
    ref2 = _reference_forward(obs_act2, params)
    assert out2.shape == (batch2, 1)
    assert jnp.allclose(out2, ref2, atol=5e-2, rtol=5e-2)

    print("KERNEL_OK")
</pallas_src>

<mosaic_0001>
module attributes {stable_mosaic.version = 11 : i64} {
  func.func @_critic_kernel(%arg0: i32, %arg1: memref<20x8xf32, #tpu.memory_space<vmem>>, %arg2: memref<32x20xf32, #tpu.memory_space<vmem>>, %arg3: memref<32x1xf32, #tpu.memory_space<vmem>>, %arg4: memref<64x32xf32, #tpu.memory_space<vmem>>, %arg5: memref<64x1xf32, #tpu.memory_space<vmem>>, %arg6: memref<32x64xf32, #tpu.memory_space<vmem>>, %arg7: memref<32x1xf32, #tpu.memory_space<vmem>>, %arg8: memref<1x32xf32, #tpu.memory_space<vmem>>, %arg9: memref<1x1xf32, #tpu.memory_space<vmem>>, %arg10: memref<1x8xf32, #tpu.memory_space<vmem>>) attributes {dimension_semantics = [#tpu.dimension_semantics<parallel>], iteration_bounds = array<i64: 1>, scalar_prefetch = 0 : i64, scratch_operands = 0 : i64, tpu.core_type = #tpu.core_type<tc>, window_params = [{transform_indices = @transform_0, window_bounds = array<i64: 20, 8>}, {pipeline_mode = #tpu.pipeline_mode<synchronous>, transform_indices = @transform_1, window_bounds = array<i64: 32, 20>}, {pipeline_mode = #tpu.pipeline_mode<synchronous>, transform_indices = @transform_2, window_bounds = array<i64: 32, 1>}, {pipeline_mode = #tpu.pipeline_mode<synchronous>, transform_indices = @transform_3, window_bounds = array<i64: 64, 32>}, {pipeline_mode = #tpu.pipeline_mode<synchronous>, transform_indices = @transform_4, window_bounds = array<i64: 64, 1>}, {pipeline_mode = #tpu.pipeline_mode<synchronous>, transform_indices = @transform_5, window_bounds = array<i64: 32, 64>}, {pipeline_mode = #tpu.pipeline_mode<synchronous>, transform_indices = @transform_6, window_bounds = array<i64: 32, 1>}, {pipeline_mode = #tpu.pipeline_mode<synchronous>, transform_indices = @transform_7, window_bounds = array<i64: 1, 32>}, {pipeline_mode = #tpu.pipeline_mode<synchronous>, transform_indices = @transform_8, window_bounds = array<i64: 1, 1>}, {transform_indices = @transform_9, window_bounds = array<i64: 1, 8>}]} {
    %c0 = arith.constant 0 : index
    %c0_0 = arith.constant 0 : index
    %0 = vector.load %arg1[%c0, %c0_0] : memref<20x8xf32, #tpu.memory_space<vmem>>, vector<20x8xf32>
    %c0_1 = arith.constant 0 : index
    %c0_2 = arith.constant 0 : index
    %1 = vector.load %arg2[%c0_1, %c0_2] : memref<32x20xf32, #tpu.memory_space<vmem>>, vector<32x20xf32>
    %cst = arith.constant dense<0.000000e+00> : vector<32x8xf32>
    %2 = tpu.matmul %1, %0, %cst {dimension_numbers = #tpu.dot_dimension_numbers<[1], [0], [0], [1], [0, 0, 1, 1], [], []>} : vector<32x20xf32>, vector<20x8xf32>, vector<32x8xf32> -> vector<32x8xf32>
    %c0_3 = arith.constant 0 : index
    %c0_4 = arith.constant 0 : index
    %3 = vector.load %arg3[%c0_3, %c0_4] : memref<32x1xf32, #tpu.memory_space<vmem>>, vector<32x1xf32>
    %4 = vector.broadcast %3 : vector<32x1xf32> to vector<32x8xf32>
    %5 = arith.addf %2, %4 : vector<32x8xf32>
    %cst_5 = arith.constant 0.000000e+00 : f32
    %6 = vector.broadcast %cst_5 : f32 to vector<32x8xf32>
    %7 = arith.maximumf %5, %6 : vector<32x8xf32>
    %c0_6 = arith.constant 0 : index
    %c0_7 = arith.constant 0 : index
    %8 = vector.load %arg4[%c0_6, %c0_7] : memref<64x32xf32, #tpu.memory_space<vmem>>, vector<64x32xf32>
    %cst_8 = arith.constant dense<0.000000e+00> : vector<64x8xf32>
    %9 = tpu.matmul %8, %7, %cst_8 {dimension_numbers = #tpu.dot_dimension_numbers<[1], [0], [0], [1], [0, 0, 1, 1], [], []>} : vector<64x32xf32>, vector<32x8xf32>, vector<64x8xf32> -> vector<64x8xf32>
    %c0_9 = arith.constant 0 : index
    %c0_10 = arith.constant 0 : index
    %10 = vector.load %arg5[%c0_9, %c0_10] : memref<64x1xf32, #tpu.memory_space<vmem>>, vector<64x1xf32>
    %11 = vector.broadcast %10 : vector<64x1xf32> to vector<64x8xf32>
    %12 = arith.addf %9, %11 : vector<64x8xf32>
    %cst_11 = arith.constant 0.000000e+00 : f32
    %13 = vector.broadcast %cst_11 : f32 to vector<64x8xf32>
    %14 = arith.maximumf %12, %13 : vector<64x8xf32>
    %c0_12 = arith.constant 0 : index
    %c0_13 = arith.constant 0 : index
    %15 = vector.load %arg6[%c0_12, %c0_13] : memref<32x64xf32, #tpu.memory_space<vmem>>, vector<32x64xf32>
    %cst_14 = arith.constant dense<0.000000e+00> : vector<32x8xf32>
    %16 = tpu.matmul %15, %14, %cst_14 {dimension_numbers = #tpu.dot_dimension_numbers<[1], [0], [0], [1], [0, 0, 1, 1], [], []>} : vector<32x64xf32>, vector<64x8xf32>, vector<32x8xf32> -> vector<32x8xf32>
    %c0_15 = arith.constant 0 : index
    %c0_16 = arith.constant 0 : index
    %17 = vector.load %arg7[%c0_15, %c0_16] : memref<32x1xf32, #tpu.memory_space<vmem>>, vector<32x1xf32>
    %18 = vector.broadcast %17 : vector<32x1xf32> to vector<32x8xf32>
    %19 = arith.addf %16, %18 : vector<32x8xf32>
    %cst_17 = arith.constant 0.000000e+00 : f32
    %20 = vector.broadcast %cst_17 : f32 to vector<32x8xf32>
    %21 = arith.maximumf %19, %20 : vector<32x8xf32>
    %c0_18 = arith.constant 0 : index
    %c0_19 = arith.constant 0 : index
    %22 = vector.load %arg8[%c0_18, %c0_19] : memref<1x32xf32, #tpu.memory_space<vmem>>, vector<1x32xf32>
    %cst_20 = arith.constant dense<0.000000e+00> : vector<1x8xf32>
    %23 = tpu.matmul %22, %21, %cst_20 {dimension_numbers = #tpu.dot_dimension_numbers<[1], [0], [0], [1], [0, 0, 1, 1], [], []>} : vector<1x32xf32>, vector<32x8xf32>, vector<1x8xf32> -> vector<1x8xf32>
    %c0_21 = arith.constant 0 : index
    %c0_22 = arith.constant 0 : index
    %24 = vector.load %arg9[%c0_21, %c0_22] : memref<1x1xf32, #tpu.memory_space<vmem>>, vector<1x1xf32>
    %25 = vector.broadcast %24 : vector<1x1xf32> to vector<1x8xf32>
    %26 = arith.addf %23, %25 : vector<1x8xf32>
    %c0_23 = arith.constant 0 : index
    %c0_24 = arith.constant 0 : index
    %27 = vector.load %arg10[%c0_23, %c0_24] : memref<1x8xf32, #tpu.memory_space<vmem>>, vector<1x8xf32>
    tpu.vector_store %arg10[%c0_23, %c0_24], %26 {strides = array<i32>} : memref<1x8xf32, #tpu.memory_space<vmem>>, vector<1x8xf32>,
    return
  }
  func.func @transform_0(%arg0: i32) -> (i32, i32) {
    %c0_i32 = arith.constant 0 : i32
    %c0_i32_0 = arith.constant 0 : i32
    return %c0_i32, %arg0 : i32, i32
  }
  func.func @transform_1(%arg0: i32) -> (i32, i32) {
    %c0_i32 = arith.constant 0 : i32
    %c0_i32_0 = arith.constant 0 : i32
    %c0_i32_1 = arith.constant 0 : i32
    return %c0_i32, %c0_i32_0 : i32, i32
  }
  func.func @transform_2(%arg0: i32) -> (i32, i32) {
    %c0_i32 = arith.constant 0 : i32
    %c0_i32_0 = arith.constant 0 : i32
    %c0_i32_1 = arith.constant 0 : i32
    return %c0_i32, %c0_i32_0 : i32, i32
  }
  func.func @transform_3(%arg0: i32) -> (i32, i32) {
    %c0_i32 = arith.constant 0 : i32
    %c0_i32_0 = arith.constant 0 : i32
    %c0_i32_1 = arith.constant 0 : i32
    return %c0_i32, %c0_i32_0 : i32, i32
  }
  func.func @transform_4(%arg0: i32) -> (i32, i32) {
    %c0_i32 = arith.constant 0 : i32
    %c0_i32_0 = arith.constant 0 : i32
    %c0_i32_1 = arith.constant 0 : i32
    return %c0_i32, %c0_i32_0 : i32, i32
  }
  func.func @transform_5(%arg0: i32) -> (i32, i32) {
    %c0_i32 = arith.constant 0 : i32
    %c0_i32_0 = arith.constant 0 : i32
    %c0_i32_1 = arith.constant 0 : i32
    return %c0_i32, %c0_i32_0 : i32, i32
  }
  func.func @transform_6(%arg0: i32) -> (i32, i32) {
    %c0_i32 = arith.constant 0 : i32
    %c0_i32_0 = arith.constant 0 : i32
    %c0_i32_1 = arith.constant 0 : i32
    return %c0_i32, %c0_i32_0 : i32, i32
  }
  func.func @transform_7(%arg0: i32) -> (i32, i32) {
    %c0_i32 = arith.constant 0 : i32
    %c0_i32_0 = arith.constant 0 : i32
    %c0_i32_1 = arith.constant 0 : i32
    return %c0_i32, %c0_i32_0 : i32, i32
  }
  func.func @transform_8(%arg0: i32) -> (i32, i32) {
    %c0_i32 = arith.constant 0 : i32
    %c0_i32_0 = arith.constant 0 : i32
    %c0_i32_1 = arith.constant 0 : i32
    return %c0_i32, %c0_i32_0 : i32, i32
  }
  func.func @transform_9(%arg0: i32) -> (i32, i32) {
    %c0_i32 = arith.constant 0 : i32
    %c0_i32_0 = arith.constant 0 : i32
    return %c0_i32, %arg0 : i32, i32
  }
}

</mosaic_0001>

<llo_original>
// kernel: tpu_custom_call.1
$region0: #{tpu_custom_call.1}
  #allocation0 [shape = 'u32[]', space=smem, size = 0x4, offset = 0x4, fixed_abs, tag = 'smem constant byte address 0x4 - core index']
  #allocation1 [shape = 'u32[144,128]{1,0:T(1,128)}', space=vmem, size = 0x12000, scoped, tag = 'internal scratch']
  #allocation2 [shape = 'f32[1,1]{1,0:T(1,128)S(1)}', space=vmem, size = 0x200, scoped, tag = 'scoped memory for tpu_custom_call.1']
  %s0 = inlined_call_operand.vmem [shape: f32[20,8], index: 0, kind: input, shape index: {}]
  %s1 = inlined_call_operand.vmem [shape: f32[32,20], index: 1, kind: input, shape index: {}]
  %s2 = inlined_call_operand.vmem [shape: f32[32,1], index: 2, kind: input, shape index: {}]
  %s3 = inlined_call_operand.vmem [shape: f32[64,32], index: 3, kind: input, shape index: {}]
  %s4 = inlined_call_operand.vmem [shape: f32[64,1], index: 4, kind: input, shape index: {}]
  %s5 = inlined_call_operand.vmem [shape: f32[32,64], index: 5, kind: input, shape index: {}]
  %s6 = inlined_call_operand.vmem [shape: f32[32,1], index: 6, kind: input, shape index: {}]
  %s7 = inlined_call_operand.vmem [shape: f32[1,32], index: 7, kind: input, shape index: {}]
  %s8 = inlined_call_operand.<no memory space> [shape: f32[1,1], index: 8, kind: input, shape index: {}]
  %s9 = inlined_call_operand.hbm [shape: f32[1,8], index: 9, kind: output, shape index: {}]
  %s10 = sld [smem:[#allocation0]]
  $region46: #{tpu_custom_call.1} parent=0
    _
  %s12 = ssub.s32 1, %s10
  %s13 = scalar_select 0, %s12, %s10
  %v14 = vstv %s8
  %15 = vst [vmem:[#allocation2] sm:$0x1] %v14
  $region1: #{tpu_custom_call.1} parent=0
    #allocation3 [shape = 'u8[512]{0}', space=vmem, size = 0x400, scoped, tag = 'output window, operand 0, single buffered']
    #allocation4 [shape = 's32[1]{0}', space=sflag, size = 0x4, scoped, tag = 'scoped memory for tpu_custom_call.1']
    %16 = vsyncpa [#allocation4], 0
    // Predicated region
    $region2: #{tpu_custom_call.1} parent=1 // pred_check
      _
    $region3: #{tpu_custom_call.1} parent=1 // pred_check_branch
      %18 = sbr.rel (0) target = $region5
    $region4: #{tpu_custom_call.1} parent=1 // pred_region
      _
    $region5: #{tpu_custom_call.1} parent=1 // pred_fallthru
      _
    // Predicated region
    $region6: #{tpu_custom_call.1} parent=1 // pred_check
      _
    $region7: #{tpu_custom_call.1} parent=1 // pred_check_branch
      %20 = sbr.rel (0) target = $region9
    $region8: #{tpu_custom_call.1} parent=1 // pred_region
      _
    $region9: #{tpu_custom_call.1} parent=1 // pred_fallthru
      _
    // Predicated region
    $region10: #{tpu_custom_call.1} parent=1 // pred_check
      _
    $region11: #{tpu_custom_call.1} parent=1 // pred_check_branch
      %22 = sbr.rel (0) target = $region13
    $region12: #{tpu_custom_call.1} parent=1 // pred_region
      _
    $region13: #{tpu_custom_call.1} parent=1 // pred_fallthru
      _
    // Predicated region
    $region14: #{tpu_custom_call.1} parent=1 // pred_check
      _
    $region15: #{tpu_custom_call.1} parent=1 // pred_check_branch
      %24 = sbr.rel (0) target = $region17
    $region16: #{tpu_custom_call.1} parent=1 // pred_region
      _
    $region17: #{tpu_custom_call.1} parent=1 // pred_fallthru
      _
    // Predicated region
    $region18: #{tpu_custom_call.1} parent=1 // pred_check
      _
    $region19: #{tpu_custom_call.1} parent=1 // pred_check_branch
      %26 = sbr.rel (0) target = $region21
    $region20: #{tpu_custom_call.1} parent=1 // pred_region
      _
    $region21: #{tpu_custom_call.1} parent=1 // pred_fallthru
      _
    // Predicated region
    $region22: #{tpu_custom_call.1} parent=1 // pred_check
      _
    $region23: #{tpu_custom_call.1} parent=1 // pred_check_branch
      %28 = sbr.rel (0) target = $region25
    $region24: #{tpu_custom_call.1} parent=1 // pred_region
      _
    $region25: #{tpu_custom_call.1} parent=1 // pred_fallthru
      _
    // Predicated region
    $region26: #{tpu_custom_call.1} parent=1 // pred_check
      _
    $region27: #{tpu_custom_call.1} parent=1 // pred_check_branch
      %30 = sbr.rel (0) target = $region29
    $region28: #{tpu_custom_call.1} parent=1 // pred_region
      _
    $region29: #{tpu_custom_call.1} parent=1 // pred_fallthru
      _
    // Predicated region
    $region30: #{tpu_custom_call.1} parent=1 // pred_check
      _
    $region31: #{tpu_custom_call.1} parent=1 // pred_check_branch
      %32 = sbr.rel (0) target = $region33
    $region32: #{tpu_custom_call.1} parent=1 // pred_region
      _
    $region33: #{tpu_custom_call.1} parent=1 // pred_fallthru
      _
    // Predicated region
    $region34: #{tpu_custom_call.1} parent=1 // pred_check
      _
    $region35: #{tpu_custom_call.1} parent=1 // pred_check_branch
      %34 = sbr.rel (0) target = $region37
    $region36: #{tpu_custom_call.1} parent=1 // pred_region
      _
    $region37: #{tpu_custom_call.1} parent=1 // pred_fallthru
      _
    %v35 = vld [vmem:[%s0] sm:$0xff]
    %v36 = vld [vmem:[%s0 + $0x8] sm:$0xff]
    %v37 = vld [vmem:[%s0 + $0x10] sm:$0xf]
    %v38 = vld [vmem:[%s1] sm:$0xff]
    %v39 = vld [vmem:[%s1 + $0x8] sm:$0xff]
    %v40 = vld [vmem:[%s1 + $0x10] sm:$0xff]
    %v41 = vld [vmem:[%s1 + $0x18] sm:$0xff]
    %v42 = vld [vmem:[%s2] sm:$0xff]
    %v43 = vld [vmem:[%s2 + $0x8] sm:$0xff]
    %v44 = vld [vmem:[%s2 + $0x10] sm:$0xff]
    %v45 = vld [vmem:[%s2 + $0x18] sm:$0xff]
    %47 = vset.pattern.permute.xlu0 0
    %48 = vperm.xlu0 %47, %v42
    %v49 = vpop.permute.xlu0 %48
    %52 = vset.pattern.permute.xlu0 0
    %53 = vperm.xlu0 %52, %v43
    %v54 = vpop.permute.xlu0 %53
    %57 = vset.pattern.permute.xlu0 0
    %58 = vperm.xlu0 %57, %v44
    %v59 = vpop.permute.xlu0 %58
    %62 = vset.pattern.permute.xlu0 0
    %63 = vperm.xlu0 %62, %v45
    %v64 = vpop.permute.xlu0 %63
    %vm66 = vcmask 162816
    %v68 = vsel %vm66, %v38, 0
    %v71 = vsel %vm66, %v39, 0
    %v74 = vsel %vm66, %v40, 0
    %v77 = vsel %vm66, %v41, 0
    %vm79 = vcmask 1043456
    %v81 = vsel %vm79, %v37, 0
    %83 = vmatprep.subr.mxu0 0.0
    %84 = vmatpush1.msra.mxu0 0.0
    %85 = vmatprep.subr.mxu0 0.0
    %86 = vmatpush1.msra.mxu0 0.0
    %87 = vmatprep.subr.mxu0 0.0
    %88 = vmatpush1.msra.mxu0 0.0
    %89 = vmatprep.subr.mxu0 0.0
    %90 = vmatpush1.msra.mxu0 0.0
    %91 = vmatprep.subr.mxu0 0.0
    %92 = vmatpush1.msra.mxu0 0.0
    %93 = vmatprep.subr.mxu0 0.0
    %94 = vmatpush1.msra.mxu0 0.0
    %95 = vmatprep.subr.mxu0 0.0
    %96 = vmatpush1.msra.mxu0 0.0
    %97 = vmatprep.subr.mxu0 0.0
    %98 = vmatpush1.msra.mxu0 0.0
    %99 = vmatprep.subr.mxu0 0.0
    %100 = vmatpush1.msra.mxu0 0.0
    %101 = vmatprep.subr.mxu0 0.0
    %102 = vmatpush1.msra.mxu0 0.0
    %103 = vmatprep.subr.mxu0 0.0
    %104 = vmatpush1.msra.mxu0 0.0
    %105 = vmatprep.subr.mxu0 0.0
    %106 = vmatpush1.msra.mxu0 0.0
    %107 = vmatprep.subr.mxu0 0.0
    %108 = vmatpush1.msra.mxu0 0.0
    %109 = vmatprep.subr.mxu0 0.0
    %110 = vmatpush1.msra.mxu0 %v81
    %111 = vmatprep.subr.mxu0 0.0
    %112 = vmatpush1.msra.mxu0 %v36
    %113 = vmatprep.subr.mxu0 0.0
    %114 = vmatpush1.msra.mxu0 %v35
    %115 = vmatprep.subr.mxu0 0.0
    %116 = vmatpush2.msra.mxu0 0.0
    %117 = vmatprep.subr.mxu0 0.0
    %118 = vmatpush2.msra.mxu0 0.0
    %119 = vmatprep.subr.mxu0 0.0
    %120 = vmatpush2.msra.mxu0 0.0
    %121 = vmatprep.subr.mxu0 0.0
    %122 = vmatpush2.msra.mxu0 0.0
    %123 = vmatprep.subr.mxu0 0.0
    %124 = vmatpush2.msra.mxu0 0.0
    %125 = vmatprep.subr.mxu0 0.0
    %126 = vmatpush2.msra.mxu0 0.0
    %127 = vmatprep.subr.mxu0 0.0
    %128 = vmatpush2.msra.mxu0 0.0
    %129 = vmatprep.subr.mxu0 0.0
    %130 = vmatpush2.msra.mxu0 0.0
    %131 = vmatprep.subr.mxu0 0.0
    %132 = vmatpush2.msra.mxu0 0.0
    %133 = vmatprep.subr.mxu0 0.0
    %134 = vmatpush2.msra.mxu0 0.0
    %135 = vmatprep.subr.mxu0 0.0
    %136 = vmatpush2.msra.mxu0 0.0
    %137 = vmatprep.subr.mxu0 0.0
    %138 = vmatpush2.msra.mxu0 0.0
    %139 = vmatprep.subr.mxu0 0.0
    %140 = vmatpush2.msra.mxu0 0.0
    %141 = vmatprep.subr.mxu0 0.0
    %142 = vmatpush2.msra.mxu0 0.0
    %143 = vmatprep.subr.mxu0 0.0
    %144 = vmatpush2.msra.mxu0 0.0
    %145 = vmatprep.subr.mxu0 0.0
    %146 = vmatpush2.msra.mxu0 0.0
    %147 = vmatprep.mubr.f32.mxu0 0.0
    %148 = vmatmul.mubr.f32.gmra.mxu0 %v68
    %v149 = vpop.f32.mrf.mxu0
    %v150 = vadd.f32 %v49, %v149
    %v151 = vpop.f32.mrf.mxu0
    %152 = vmatprep.mubr.f32.mxu0 0.0
    %153 = vmatmul.mubr.f32.gmra.mxu0 %v71
    %v154 = vpop.f32.mrf.mxu0
    %v155 = vadd.f32 %v54, %v154
    %v156 = vpop.f32.mrf.mxu0
    %157 = vmatprep.mubr.f32.mxu0 0.0
    %158 = vmatmul.mubr.f32.gmra.mxu0 %v74
    %v159 = vpop.f32.mrf.mxu0
    %v160 = vadd.f32 %v59, %v159
    %v161 = vpop.f32.mrf.mxu0
    %162 = vmatprep.mubr.f32.mxu0 0.0
    %163 = vmatmul.mubr.f32.gmra.mxu0 %v77
    %v164 = vpop.f32.mrf.mxu0
    %v165 = vadd.f32 %v64, %v164
    %v166 = vpop.f32.mrf.mxu0
    %167 = vdwg.mxu0
    %v168 = vmax.f32 %v150, 0.0
    %v169 = vmax.f32 %v155, 0.0
    %v170 = vmax.f32 %v160, 0.0
    %v171 = vmax.f32 %v165, 0.0
    %v172 = vld [vmem:[%s3] sm:$0xff]
    %v173 = vld [vmem:[%s3 + $0x8] sm:$0xff]
    %v174 = vld [vmem:[%s3 + $0x10] sm:$0xff]
    %v175 = vld [vmem:[%s3 + $0x18] sm:$0xff]
    %v176 = vld [vmem:[%s3 + $0x20] sm:$0xff]
    %v177 = vld [vmem:[%s3 + $0x28] sm:$0xff]
    %v178 = vld [vmem:[%s3 + $0x30] sm:$0xff]
    %v179 = vld [vmem:[%s3 + $0x38] sm:$0xff]
    %v180 = vld [vmem:[%s4] sm:$0xff]
    %v181 = vld [vmem:[%s4 + $0x8] sm:$0xff]
    %v182 = vld [vmem:[%s4 + $0x10] sm:$0xff]
    %v183 = vld [vmem:[%s4 + $0x18] sm:$0xff]
    %v184 = vld [vmem:[%s4 + $0x20] sm:$0xff]
    %v185 = vld [vmem:[%s4 + $0x28] sm:$0xff]
    %v186 = vld [vmem:[%s4 + $0x30] sm:$0xff]
    %v187 = vld [vmem:[%s4 + $0x38] sm:$0xff]
    %189 = vset.pattern.permute.xlu0 0
    %190 = vperm.xlu0 %189, %v180
    %v191 = vpop.permute.xlu0 %190
    %194 = vset.pattern.permute.xlu0 0
    %195 = vperm.xlu0 %194, %v181
    %v196 = vpop.permute.xlu0 %195
    %199 = vset.pattern.permute.xlu0 0
    %200 = vperm.xlu0 %199, %v182
    %v201 = vpop.permute.xlu0 %200
    %204 = vset.pattern.permute.xlu0 0
    %205 = vperm.xlu0 %204, %v183
    %v206 = vpop.permute.xlu0 %205
    %209 = vset.pattern.permute.xlu0 0
    %210 = vperm.xlu0 %209, %v184
    %v211 = vpop.permute.xlu0 %210
    %214 = vset.pattern.permute.xlu0 0
    %215 = vperm.xlu0 %214, %v185
    %v216 = vpop.permute.xlu0 %215
    %219 = vset.pattern.permute.xlu0 0
    %220 = vperm.xlu0 %219, %v186
    %v221 = vpop.permute.xlu0 %220
    %224 = vset.pattern.permute.xlu0 0
    %225 = vperm.xlu0 %224, %v187
    %v226 = vpop.permute.xlu0 %225
    %vm228 = vcmask 261120
    %v230 = vsel %vm228, %v172, 0
    %v233 = vsel %vm228, %v173, 0
    %v236 = vsel %vm228, %v174, 0
    %v239 = vsel %vm228, %v175, 0
    %v242 = vsel %vm228, %v176, 0
    %v245 = vsel %vm228, %v177, 0
    %v248 = vsel %vm228, %v178, 0
    %v251 = vsel %vm228, %v179, 0
    %253 = vmatprep.subr.mxu0 0.0
    %254 = vmatpush1.msra.mxu0 0.0
    %255 = vmatprep.subr.mxu0 0.0
    %256 = vmatpush1.msra.mxu0 0.0
    %257 = vmatprep.subr.mxu0 0.0
    %258 = vmatpush1.msra.mxu0 0.0
    %259 = vmatprep.subr.mxu0 0.0
    %260 = vmatpush1.msra.mxu0 0.0
    %261 = vmatprep.subr.mxu0 0.0
    %262 = vmatpush1.msra.mxu0 0.0
    %263 = vmatprep.subr.mxu0 0.0
    %264 = vmatpush1.msra.mxu0 0.0
    %265 = vmatprep.subr.mxu0 0.0
    %266 = vmatpush1.msra.mxu0 0.0
    %267 = vmatprep.subr.mxu0 0.0
    %268 = vmatpush1.msra.mxu0 0.0
    %269 = vmatprep.subr.mxu0 0.0
    %270 = vmatpush1.msra.mxu0 0.0
    %271 = vmatprep.subr.mxu0 0.0
    %272 = vmatpush1.msra.mxu0 0.0
    %273 = vmatprep.subr.mxu0 0.0
    %274 = vmatpush1.msra.mxu0 0.0
    %275 = vmatprep.subr.mxu0 0.0
    %276 = vmatpush1.msra.mxu0 0.0
    %277 = vmatprep.subr.mxu0 0.0
    %278 = vmatpush1.msra.mxu0 %v171
    %279 = vmatprep.subr.mxu0 0.0
    %280 = vmatpush1.msra.mxu0 %v170
    %281 = vmatprep.subr.mxu0 0.0
    %282 = vmatpush1.msra.mxu0 %v169
    %283 = vmatprep.subr.mxu0 0.0
    %284 = vmatpush1.msra.mxu0 %v168
    %285 = vmatprep.subr.mxu0 0.0
    %286 = vmatpush2.msra.mxu0 0.0
    %287 = vmatprep.subr.mxu0 0.0
    %288 = vmatpush2.msra.mxu0 0.0
    %289 = vmatprep.subr.mxu0 0.0
    %290 = vmatpush2.msra.mxu0 0.0
    %291 = vmatprep.subr.mxu0 0.0
    %292 = vmatpush2.msra.mxu0 0.0
    %293 = vmatprep.subr.mxu0 0.0
    %294 = vmatpush2.msra.mxu0 0.0
    %295 = vmatprep.subr.mxu0 0.0
    %296 = vmatpush2.msra.mxu0 0.0
    %297 = vmatprep.subr.mxu0 0.0
    %298 = vmatpush2.msra.mxu0 0.0
    %299 = vmatprep.subr.mxu0 0.0
    %300 = vmatpush2.msra.mxu0 0.0
    %301 = vmatprep.subr.mxu0 0.0
    %302 = vmatpush2.msra.mxu0 0.0
    %303 = vmatprep.subr.mxu0 0.0
    %304 = vmatpush2.msra.mxu0 0.0
    %305 = vmatprep.subr.mxu0 0.0
    %306 = vmatpush2.msra.mxu0 0.0
    %307 = vmatprep.subr.mxu0 0.0
    %308 = vmatpush2.msra.mxu0 0.0
    %309 = vmatprep.subr.mxu0 0.0
    %310 = vmatpush2.msra.mxu0 0.0
    %311 = vmatprep.subr.mxu0 0.0
    %312 = vmatpush2.msra.mxu0 0.0
    %313 = vmatprep.subr.mxu0 0.0
    %314 = vmatpush2.msra.mxu0 0.0
    %315 = vmatprep.subr.mxu0 0.0
    %316 = vmatpush2.msra.mxu0 0.0
    %317 = vmatprep.mubr.f32.mxu0 0.0
    %318 = vmatmul.mubr.f32.gmra.mxu0 %v230
    %v319 = vpop.f32.mrf.mxu0
    %v320 = vadd.f32 %v191, %v319
    %v321 = vpop.f32.mrf.mxu0
    %322 = vmatprep.mubr.f32.mxu0 0.0
    %323 = vmatmul.mubr.f32.gmra.mxu0 %v233
    %v324 = vpop.f32.mrf.mxu0
    %v325 = vadd.f32 %v196, %v324
    %v326 = vpop.f32.mrf.mxu0
    %327 = vmatprep.mubr.f32.mxu0 0.0
    %328 = vmatmul.mubr.f32.gmra.mxu0 %v236
    %v329 = vpop.f32.mrf.mxu0
    %v330 = vadd.f32 %v201, %v329
    %v331 = vpop.f32.mrf.mxu0
    %332 = vmatprep.mubr.f32.mxu0 0.0
    %333 = vmatmul.mubr.f32.gmra.mxu0 %v239
    %v334 = vpop.f32.mrf.mxu0
    %v335 = vadd.f32 %v206, %v334
    %v336 = vpop.f32.mrf.mxu0
    %337 = vmatprep.mubr.f32.mxu0 0.0
    %338 = vmatmul.mubr.f32.gmra.mxu0 %v242
    %v339 = vpop.f32.mrf.mxu0
    %v340 = vadd.f32 %v211, %v339
    %v341 = vpop.f32.mrf.mxu0
    %342 = vmatprep.mubr.f32.mxu0 0.0
    %343 = vmatmul.mubr.f32.gmra.mxu0 %v245
    %v344 = vpop.f32.mrf.mxu0
    %v345 = vadd.f32 %v216, %v344
    %v346 = vpop.f32.mrf.mxu0
    %347 = vmatprep.mubr.f32.mxu0 0.0
    %348 = vmatmul.mubr.f32.gmra.mxu0 %v248
    %v349 = vpop.f32.mrf.mxu0
    %v350 = vadd.f32 %v221, %v349
    %v351 = vpop.f32.mrf.mxu0
    %352 = vmatprep.mubr.f32.mxu0 0.0
    %353 = vmatmul.mubr.f32.gmra.mxu0 %v251
    %v354 = vpop.f32.mrf.mxu0
    %v355 = vadd.f32 %v226, %v354
    %v356 = vpop.f32.mrf.mxu0
    %357 = vdwg.mxu0
    %v358 = vmax.f32 %v320, 0.0
    %v359 = vmax.f32 %v325, 0.0
    %v360 = vmax.f32 %v330, 0.0
    %v361 = vmax.f32 %v335, 0.0
    %v362 = vmax.f32 %v340, 0.0
    %v363 = vmax.f32 %v345, 0.0
    %v364 = vmax.f32 %v350, 0.0
    %v365 = vmax.f32 %v355, 0.0
    %v366 = vld [vmem:[%s5] sm:$0xff]
    %v367 = vld [vmem:[%s5 + $0x8] sm:$0xff]
    %v368 = vld [vmem:[%s5 + $0x10] sm:$0xff]
    %v369 = vld [vmem:[%s5 + $0x18] sm:$0xff]
    %v370 = vld [vmem:[%s6] sm:$0xff]
    %v371 = vld [vmem:[%s6 + $0x8] sm:$0xff]
    %v372 = vld [vmem:[%s6 + $0x10] sm:$0xff]
    %v373 = vld [vmem:[%s6 + $0x18] sm:$0xff]
    %375 = vset.pattern.permute.xlu0 0
    %376 = vperm.xlu0 %375, %v370
    %v377 = vpop.permute.xlu0 %376
    %380 = vset.pattern.permute.xlu0 0
    %381 = vperm.xlu0 %380, %v371
    %v382 = vpop.permute.xlu0 %381
    %385 = vset.pattern.permute.xlu0 0
    %386 = vperm.xlu0 %385, %v372
    %v387 = vpop.permute.xlu0 %386
    %390 = vset.pattern.permute.xlu0 0
    %391 = vperm.xlu0 %390, %v373
    %v392 = vpop.permute.xlu0 %391
    %vm394 = vcmask 523264
    %v396 = vsel %vm394, %v366, 0
    %v399 = vsel %vm394, %v367, 0
    %v402 = vsel %vm394, %v368, 0
    %v405 = vsel %vm394, %v369, 0
    %407 = vmatprep.subr.mxu0 0.0
    %408 = vmatpush1.msra.mxu0 0.0
    %409 = vmatprep.subr.mxu0 0.0
    %410 = vmatpush1.msra.mxu0 0.0
    %411 = vmatprep.subr.mxu0 0.0
    %412 = vmatpush1.msra.mxu0 0.0
    %413 = vmatprep.subr.mxu0 0.0
    %414 = vmatpush1.msra.mxu0 0.0
    %415 = vmatprep.subr.mxu0 0.0
    %416 = vmatpush1.msra.mxu0 0.0
    %417 = vmatprep.subr.mxu0 0.0
    %418 = vmatpush1.msra.mxu0 0.0
    %419 = vmatprep.subr.mxu0 0.0
    %420 = vmatpush1.msra.mxu0 0.0
    %421 = vmatprep.subr.mxu0 0.0
    %422 = vmatpush1.msra.mxu0 0.0
    %423 = vmatprep.subr.mxu0 0.0
    %424 = vmatpush1.msra.mxu0 %v365
    %425 = vmatprep.subr.mxu0 0.0
    %426 = vmatpush1.msra.mxu0 %v364
    %427 = vmatprep.subr.mxu0 0.0
    %428 = vmatpush1.msra.mxu0 %v363
    %429 = vmatprep.subr.mxu0 0.0
    %430 = vmatpush1.msra.mxu0 %v362
    %431 = vmatprep.subr.mxu0 0.0
    %432 = vmatpush1.msra.mxu0 %v361
    %433 = vmatprep.subr.mxu0 0.0
    %434 = vmatpush1.msra.mxu0 %v360
    %435 = vmatprep.subr.mxu0 0.0
    %436 = vmatpush1.msra.mxu0 %v359
    %437 = vmatprep.subr.mxu0 0.0
    %438 = vmatpush1.msra.mxu0 %v358
    %439 = vmatprep.subr.mxu0 0.0
    %440 = vmatpush2.msra.mxu0 0.0
    %441 = vmatprep.subr.mxu0 0.0
    %442 = vmatpush2.msra.mxu0 0.0
    %443 = vmatprep.subr.mxu0 0.0
    %444 = vmatpush2.msra.mxu0 0.0
    %445 = vmatprep.subr.mxu0 0.0
    %446 = vmatpush2.msra.mxu0 0.0
    %447 = vmatprep.subr.mxu0 0.0
    %448 = vmatpush2.msra.mxu0 0.0
    %449 = vmatprep.subr.mxu0 0.0
    %450 = vmatpush2.msra.mxu0 0.0
    %451 = vmatprep.subr.mxu0 0.0
    %452 = vmatpush2.msra.mxu0 0.0
    %453 = vmatprep.subr.mxu0 0.0
    %454 = vmatpush2.msra.mxu0 0.0
    %455 = vmatprep.subr.mxu0 0.0
    %456 = vmatpush2.msra.mxu0 0.0
    %457 = vmatprep.subr.mxu0 0.0
    %458 = vmatpush2.msra.mxu0 0.0
    %459 = vmatprep.subr.mxu0 0.0
    %460 = vmatpush2.msra.mxu0 0.0
    %461 = vmatprep.subr.mxu0 0.0
    %462 = vmatpush2.msra.mxu0 0.0
    %463 = vmatprep.subr.mxu0 0.0
    %464 = vmatpush2.msra.mxu0 0.0
    %465 = vmatprep.subr.mxu0 0.0
    %466 = vmatpush2.msra.mxu0 0.0
    %467 = vmatprep.subr.mxu0 0.0
    %468 = vmatpush2.msra.mxu0 0.0
    %469 = vmatprep.subr.mxu0 0.0
    %470 = vmatpush2.msra.mxu0 0.0
    %471 = vmatprep.mubr.f32.mxu0 0.0
    %472 = vmatmul.mubr.f32.gmra.mxu0 %v396
    %v473 = vpop.f32.mrf.mxu0
    %v474 = vadd.f32 %v377, %v473
    %v475 = vpop.f32.mrf.mxu0
    %476 = vmatprep.mubr.f32.mxu0 0.0
    %477 = vmatmul.mubr.f32.gmra.mxu0 %v399
    %v478 = vpop.f32.mrf.mxu0
    %v479 = vadd.f32 %v382, %v478
    %v480 = vpop.f32.mrf.mxu0
    %481 = vmatprep.mubr.f32.mxu0 0.0
    %482 = vmatmul.mubr.f32.gmra.mxu0 %v402
    %v483 = vpop.f32.mrf.mxu0
    %v484 = vadd.f32 %v387, %v483
    %v485 = vpop.f32.mrf.mxu0
    %486 = vmatprep.mubr.f32.mxu0 0.0
    %487 = vmatmul.mubr.f32.gmra.mxu0 %v405
    %v488 = vpop.f32.mrf.mxu0
    %v489 = vadd.f32 %v392, %v488
    %v490 = vpop.f32.mrf.mxu0
    %491 = vdwg.mxu0
    %v492 = vmax.f32 %v474, 0.0
    %v493 = vmax.f32 %v479, 0.0
    %v494 = vmax.f32 %v484, 0.0
    %v495 = vmax.f32 %v489, 0.0
    %v496 = vld [vmem:[%s7] sm:$0x1]
    %v497 = vld [vmem:[#allocation2] sm:$0x1]
    %499 = vset.pattern.permute.xlu0 0
    %500 = vperm.xlu0 %499, %v497
    %v501 = vpop.permute.xlu0 %500
    %v503 = vlaneseq
    %v504 = vshrl.u32 %v503, 7
    %v505 = vsub.s32 0, %v504
    %v506 = vrot.slane %v501, %v505
    %v508 = vsel %vm228, %v496, 0
    %510 = vmatprep.subr.mxu0 0.0
    %511 = vmatpush1.msra.mxu0 0.0
    %512 = vmatprep.subr.mxu0 0.0
    %513 = vmatpush1.msra.mxu0 0.0
    %514 = vmatprep.subr.mxu0 0.0
    %515 = vmatpush1.msra.mxu0 0.0
    %516 = vmatprep.subr.mxu0 0.0
    %517 = vmatpush1.msra.mxu0 0.0
    %518 = vmatprep.subr.mxu0 0.0
    %519 = vmatpush1.msra.mxu0 0.0
    %520 = vmatprep.subr.mxu0 0.0
    %521 = vmatpush1.msra.mxu0 0.0
    %522 = vmatprep.subr.mxu0 0.0
    %523 = vmatpush1.msra.mxu0 0.0
    %524 = vmatprep.subr.mxu0 0.0
    %525 = vmatpush1.msra.mxu0 0.0
    %526 = vmatprep.subr.mxu0 0.0
    %527 = vmatpush1.msra.mxu0 0.0
    %528 = vmatprep.subr.mxu0 0.0
    %529 = vmatpush1.msra.mxu0 0.0
    %530 = vmatprep.subr.mxu0 0.0
    %531 = vmatpush1.msra.mxu0 0.0
    %532 = vmatprep.subr.mxu0 0.0
    %533 = vmatpush1.msra.mxu0 0.0
    %534 = vmatprep.subr.mxu0 0.0
    %535 = vmatpush1.msra.mxu0 %v495
    %536 = vmatprep.subr.mxu0 0.0
    %537 = vmatpush1.msra.mxu0 %v494
    %538 = vmatprep.subr.mxu0 0.0
    %539 = vmatpush1.msra.mxu0 %v493
    %540 = vmatprep.subr.mxu0 0.0
    %541 = vmatpush1.msra.mxu0 %v492
    %542 = vmatprep.subr.mxu0 0.0
    %543 = vmatpush2.msra.mxu0 0.0
    %544 = vmatprep.subr.mxu0 0.0
    %545 = vmatpush2.msra.mxu0 0.0
    %546 = vmatprep.subr.mxu0 0.0
    %547 = vmatpush2.msra.mxu0 0.0
    %548 = vmatprep.subr.mxu0 0.0
    %549 = vmatpush2.msra.mxu0 0.0
    %550 = vmatprep.subr.mxu0 0.0
    %551 = vmatpush2.msra.mxu0 0.0
    %552 = vmatprep.subr.mxu0 0.0
    %553 = vmatpush2.msra.mxu0 0.0
    %554 = vmatprep.subr.mxu0 0.0
    %555 = vmatpush2.msra.mxu0 0.0
    %556 = vmatprep.subr.mxu0 0.0
    %557 = vmatpush2.msra.mxu0 0.0
    %558 = vmatprep.subr.mxu0 0.0
    %559 = vmatpush2.msra.mxu0 0.0
    %560 = vmatprep.subr.mxu0 0.0
    %561 = vmatpush2.msra.mxu0 0.0
    %562 = vmatprep.subr.mxu0 0.0
    %563 = vmatpush2.msra.mxu0 0.0
    %564 = vmatprep.subr.mxu0 0.0
    %565 = vmatpush2.msra.mxu0 0.0
    %566 = vmatprep.subr.mxu0 0.0
    %567 = vmatpush2.msra.mxu0 0.0
    %568 = vmatprep.subr.mxu0 0.0
    %569 = vmatpush2.msra.mxu0 0.0
    %570 = vmatprep.subr.mxu0 0.0
    %571 = vmatpush2.msra.mxu0 0.0
    %572 = vmatprep.subr.mxu0 0.0
    %573 = vmatpush2.msra.mxu0 0.0
    %574 = vmatprep.mubr.f32.mxu0 0.0
    %575 = vmatmul.mubr.f32.gmra.mxu0 %v508
    %v576 = vpop.f32.mrf.mxu0
    %v577 = vadd.f32 %v506, %v576
    %v578 = vpop.f32.mrf.mxu0
    %579 = vdwg.mxu0
    %vm580 = vcmask 57344
    %581 = vst.msk [vmem:[#allocation3] sm:$0x1] %vm580, %v577
    // Predicated region
    $region38: #{tpu_custom_call.1} parent=1 // pred_check
      _
    $region39: #{tpu_custom_call.1} parent=1 // pred_check_branch
      %583 = sbr.rel (0) target = $region41
    $region40: #{tpu_custom_call.1} parent=1 // pred_region
      %s585 = ssub.s32 16, 16
      %586 = vsyncadd [#allocation4], %s585
      %s588 = sshll.u32 [#allocation3], 4
      %s589 = int_to_ptr.vmem [resolvable:$true] %s588
      %591 = dma.vmem_to_hbm [thread:$0]  %s589, 16, %s9, [#allocation4]
    $region41: #{tpu_custom_call.1} parent=1 // pred_fallthru
      _
    // Predicated region
    $region42: #{tpu_custom_call.1} parent=1 // pred_check
      _
    $region43: #{tpu_custom_call.1} parent=1 // pred_check_branch
      %593 = sbr.rel (0) target = $region45
    $region44: #{tpu_custom_call.1} parent=1 // pred_region
      %594 = dma.done [#allocation4], 16
    $region45: #{tpu_custom_call.1} parent=1 // pred_fallthru
      _
    %595 = vsyncpa [#allocation4], 1

</llo_original>
